<compile_context>
chip_gen: v7x
topology: tpu7x:2x2x1
jax: 0.10.0
libtpu: 0.0.40
codegen_flags: <defaults>
</compile_context>

<pallas_src>
import functools

import jax
import jax.numpy as jnp
from jax.experimental import pallas as pl
from jax.experimental.pallas import tpu as pltpu

LANE = 128          # TPU lane width — output padded to a multiple of this
SUBLANE = 8         # minimum sublane granularity for the batch tile
DEFAULT_TILE_B = 512  # large batch tile: ~85% of HBM roofline per the notes


def _round_up(x, m):
    return ((x + m - 1) // m) * m


def mlp_kernel(x_ref,
               w1_ref, b1_ref,
               w2_ref, b2_ref,
               w3_ref, b3_ref,
               w4_ref, b4_ref,
               o_ref):
    """One (TILE_B, states) tile of the batch through the whole MLP."""
    cdt = w1_ref.dtype  # compute dtype for MXU inputs (bf16)

    # Layer 1: Linear + ReLU   (bf16 matmul, f32 accumulate + elementwise)
    h = jnp.dot(x_ref[...], w1_ref[...], preferred_element_type=jnp.float32)
    h = jnp.maximum(h + b1_ref[...], 0.0)
    # Layer 2: Linear + ReLU
    h = jnp.dot(h.astype(cdt), w2_ref[...], preferred_element_type=jnp.float32)
    h = jnp.maximum(h + b2_ref[...], 0.0)
    # Layer 3: Linear + ReLU
    h = jnp.dot(h.astype(cdt), w3_ref[...], preferred_element_type=jnp.float32)
    h = jnp.maximum(h + b3_ref[...], 0.0)
    # Layer 4: Linear (no activation); N is lane-padded to a multiple of 128
    h = jnp.dot(h.astype(cdt), w4_ref[...], preferred_element_type=jnp.float32)
    o_ref[...] = (h + b4_ref[...]).astype(o_ref.dtype)


def network_1_forward(x, params, *, tile_b=DEFAULT_TILE_B):
    """x: (batch, states) f32/bf16.  params: list of (W_t, b), W_t (in, out) bf16, b (1, out) f32."""
    batch, states = x.shape
    actions = params[-1][0].shape[1]
    out_pad = _round_up(max(actions, LANE), LANE)

    # ---- batch tiling ------------------------------------------------------
    pb8 = _round_up(batch, SUBLANE)
    tile_b = min(tile_b, pb8)
    padded_batch = _round_up(pb8, tile_b)
    num_tiles = padded_batch // tile_b

    x_c = x.astype(jnp.bfloat16)
    if padded_batch != batch:
        x_c = jnp.pad(x_c, ((0, padded_batch - batch), (0, 0)))

    # ---- lane-pad the final layer so output stores are lane-dense ----------
    w4, b4 = params[-1]
    if out_pad != actions:
        w4 = jnp.pad(w4, ((0, 0), (0, out_pad - actions)))   # zero columns
        b4 = jnp.pad(b4, ((0, 0), (0, out_pad - actions)))
    padded_params = list(params[:-1]) + [(w4, b4)]

    # ---- specs -------------------------------------------------------------
    in_specs = [pl.BlockSpec((tile_b, states), lambda i: (i, 0))]
    flat_args = [x_c]
    for w, b in padded_params:
        # Weights/biases: full-array blocks, same block index every grid step
        # -> DMA'd once and kept resident in VMEM.
        in_specs.append(pl.BlockSpec(w.shape, lambda i: (0, 0)))
        in_specs.append(pl.BlockSpec(b.shape, lambda i: (0, 0)))
        flat_args.extend([w, b])
    out_specs = pl.BlockSpec((tile_b, out_pad), lambda i: (i, 0))

    # ---- cost estimate (helps XLA schedule around the custom call) ---------
    layer_dims = [(w.shape[0], w.shape[1]) for w, _ in padded_params]
    flops = 2 * padded_batch * sum(fi * fo for fi, fo in layer_dims)
    bytes_accessed = (
        x_c.size * x_c.dtype.itemsize
        + sum(w.size * w.dtype.itemsize + b.size * b.dtype.itemsize
              for w, b in padded_params)
        + padded_batch * out_pad * 4
    )

    out = pl.pallas_call(
        mlp_kernel,
        out_shape=jax.ShapeDtypeStruct((padded_batch, out_pad), jnp.float32),
        grid=(num_tiles,),
        in_specs=in_specs,
        out_specs=out_specs,
        compiler_params=pltpu.CompilerParams(
            dimension_semantics=("parallel",),   # v7x: shard batch over 2 TCs
        ),
        cost_estimate=pl.CostEstimate(
            flops=int(flops), transcendentals=0,
            bytes_accessed=int(bytes_accessed)),
    )(*flat_args)

    # Strip batch padding and the zero lane padding of the final layer.
    return out[:batch, :actions]


def init_params(key, states, actions, hidden):
    """Mirror nn.Linear default init; store W transposed as (in, out).

    Weights are kept in bf16 (native MXU path, half the DMA bytes); biases in
    f32 since the post-dot elementwise math runs in f32.
    """
    dims = [(states, hidden),
            (hidden, hidden // 2),
            (hidden // 2, hidden // 4),
            (hidden // 4, actions)]
    params = []
    for (fan_in, fan_out) in dims:
        key, kw, kb = jax.random.split(key, 3)
        bound = 1.0 / jnp.sqrt(jnp.float32(fan_in))  # U(-1/sqrt(in), 1/sqrt(in))
        w_t = jax.random.uniform(kw, (fan_in, fan_out), jnp.float32, -bound, bound)
        b = jax.random.uniform(kb, (1, fan_out), jnp.float32, -bound, bound)
        params.append((w_t.astype(jnp.bfloat16), b))
    return params


def reference_forward(x, params):
    """Pure-JAX reference with the same bf16-inputs / f32-accumulate recipe."""
    h = x.astype(jnp.bfloat16)
    for i, (w, b) in enumerate(params):
        h = jnp.dot(h, w, preferred_element_type=jnp.float32) + b
        if i < len(params) - 1:
            h = jnp.maximum(h, 0.0)
        if i < len(params) - 1:
            h = h.astype(jnp.bfloat16)
    return h


if __name__ == "__main__":
    batch, states, actions, hidden = 8, 16, 4, 32

    key = jax.random.PRNGKey(0)
    key, kx = jax.random.split(key)
    x = jax.random.normal(kx, (batch, states), jnp.float32)

    params = init_params(key, states, actions, hidden)

    out = network_1_forward(x, params)
    out = jax.block_until_ready(out)

    ref = reference_forward(x, params)
    assert out.shape == (batch, actions), out.shape
    assert jnp.allclose(out, ref, atol=2e-2, rtol=2e-2), "mismatch vs reference"

    print("KERNEL_OK")
</pallas_src>

<mosaic_0001>
module attributes {stable_mosaic.version = 11 : i64} {
  func.func @mlp_kernel(%arg0: i32, %arg1: memref<8x16xbf16, #tpu.memory_space<vmem>>, %arg2: memref<16x32xbf16, #tpu.memory_space<vmem>>, %arg3: memref<1x32xf32, #tpu.memory_space<vmem>>, %arg4: memref<32x16xbf16, #tpu.memory_space<vmem>>, %arg5: memref<1x16xf32, #tpu.memory_space<vmem>>, %arg6: memref<16x8xbf16, #tpu.memory_space<vmem>>, %arg7: memref<1x8xf32, #tpu.memory_space<vmem>>, %arg8: memref<8x128xbf16, #tpu.memory_space<vmem>>, %arg9: memref<1x128xf32, #tpu.memory_space<vmem>>, %arg10: memref<8x128xf32, #tpu.memory_space<vmem>>) attributes {dimension_semantics = [#tpu.dimension_semantics<parallel>], iteration_bounds = array<i64: 1>, scalar_prefetch = 0 : i64, scratch_operands = 0 : i64, tpu.core_type = #tpu.core_type<tc>, window_params = [{transform_indices = @transform_0, window_bounds = array<i64: 8, 16>}, {pipeline_mode = #tpu.pipeline_mode<synchronous>, transform_indices = @transform_1, window_bounds = array<i64: 16, 32>}, {pipeline_mode = #tpu.pipeline_mode<synchronous>, transform_indices = @transform_2, window_bounds = array<i64: 1, 32>}, {pipeline_mode = #tpu.pipeline_mode<synchronous>, transform_indices = @transform_3, window_bounds = array<i64: 32, 16>}, {pipeline_mode = #tpu.pipeline_mode<synchronous>, transform_indices = @transform_4, window_bounds = array<i64: 1, 16>}, {pipeline_mode = #tpu.pipeline_mode<synchronous>, transform_indices = @transform_5, window_bounds = array<i64: 16, 8>}, {pipeline_mode = #tpu.pipeline_mode<synchronous>, transform_indices = @transform_6, window_bounds = array<i64: 1, 8>}, {pipeline_mode = #tpu.pipeline_mode<synchronous>, transform_indices = @transform_7, window_bounds = array<i64: 8, 128>}, {pipeline_mode = #tpu.pipeline_mode<synchronous>, transform_indices = @transform_8, window_bounds = array<i64: 1, 128>}, {transform_indices = @transform_9, window_bounds = array<i64: 8, 128>}]} {
    %c0 = arith.constant 0 : index
    %c0_0 = arith.constant 0 : index
    %0 = vector.load %arg1[%c0, %c0_0] : memref<8x16xbf16, #tpu.memory_space<vmem>>, vector<8x16xbf16>
    %c0_1 = arith.constant 0 : index
    %c0_2 = arith.constant 0 : index
    %1 = vector.load %arg2[%c0_1, %c0_2] : memref<16x32xbf16, #tpu.memory_space<vmem>>, vector<16x32xbf16>
    %cst = arith.constant dense<0.000000e+00> : vector<8x32xf32>
    %2 = tpu.matmul %0, %1, %cst {dimension_numbers = #tpu.dot_dimension_numbers<[1], [0], [0], [1], [0, 0, 1, 1], [], []>} : vector<8x16xbf16>, vector<16x32xbf16>, vector<8x32xf32> -> vector<8x32xf32>
    %c0_3 = arith.constant 0 : index
    %c0_4 = arith.constant 0 : index
    %3 = vector.load %arg3[%c0_3, %c0_4] : memref<1x32xf32, #tpu.memory_space<vmem>>, vector<1x32xf32>
    %4 = vector.broadcast %3 : vector<1x32xf32> to vector<8x32xf32>
    %5 = arith.addf %2, %4 : vector<8x32xf32>
    %cst_5 = arith.constant 0.000000e+00 : f32
    %6 = vector.broadcast %cst_5 : f32 to vector<8x32xf32>
    %7 = arith.maximumf %5, %6 : vector<8x32xf32>
    %8 = arith.truncf %7 : vector<8x32xf32> to vector<8x32xbf16>
    %c0_6 = arith.constant 0 : index
    %c0_7 = arith.constant 0 : index
    %9 = vector.load %arg4[%c0_6, %c0_7] : memref<32x16xbf16, #tpu.memory_space<vmem>>, vector<32x16xbf16>
    %cst_8 = arith.constant dense<0.000000e+00> : vector<8x16xf32>
    %10 = tpu.matmul %8, %9, %cst_8 {dimension_numbers = #tpu.dot_dimension_numbers<[1], [0], [0], [1], [0, 0, 1, 1], [], []>} : vector<8x32xbf16>, vector<32x16xbf16>, vector<8x16xf32> -> vector<8x16xf32>
    %c0_9 = arith.constant 0 : index
    %c0_10 = arith.constant 0 : index
    %11 = vector.load %arg5[%c0_9, %c0_10] : memref<1x16xf32, #tpu.memory_space<vmem>>, vector<1x16xf32>
    %12 = vector.broadcast %11 : vector<1x16xf32> to vector<8x16xf32>
    %13 = arith.addf %10, %12 : vector<8x16xf32>
    %cst_11 = arith.constant 0.000000e+00 : f32
    %14 = vector.broadcast %cst_11 : f32 to vector<8x16xf32>
    %15 = arith.maximumf %13, %14 : vector<8x16xf32>
    %16 = arith.truncf %15 : vector<8x16xf32> to vector<8x16xbf16>
    %c0_12 = arith.constant 0 : index
    %c0_13 = arith.constant 0 : index
    %17 = vector.load %arg6[%c0_12, %c0_13] : memref<16x8xbf16, #tpu.memory_space<vmem>>, vector<16x8xbf16>
    %cst_14 = arith.constant dense<0.000000e+00> : vector<8x8xf32>
    %18 = tpu.matmul %16, %17, %cst_14 {dimension_numbers = #tpu.dot_dimension_numbers<[1], [0], [0], [1], [0, 0, 1, 1], [], []>} : vector<8x16xbf16>, vector<16x8xbf16>, vector<8x8xf32> -> vector<8x8xf32>
    %c0_15 = arith.constant 0 : index
    %c0_16 = arith.constant 0 : index
    %19 = vector.load %arg7[%c0_15, %c0_16] : memref<1x8xf32, #tpu.memory_space<vmem>>, vector<1x8xf32>
    %20 = vector.broadcast %19 : vector<1x8xf32> to vector<8x8xf32>
    %21 = arith.addf %18, %20 : vector<8x8xf32>
    %cst_17 = arith.constant 0.000000e+00 : f32
    %22 = vector.broadcast %cst_17 : f32 to vector<8x8xf32>
    %23 = arith.maximumf %21, %22 : vector<8x8xf32>
    %24 = arith.truncf %23 : vector<8x8xf32> to vector<8x8xbf16>
    %c0_18 = arith.constant 0 : index
    %c0_19 = arith.constant 0 : index
    %25 = vector.load %arg8[%c0_18, %c0_19] : memref<8x128xbf16, #tpu.memory_space<vmem>>, vector<8x128xbf16>
    %cst_20 = arith.constant dense<0.000000e+00> : vector<8x128xf32>
    %26 = tpu.matmul %24, %25, %cst_20 {dimension_numbers = #tpu.dot_dimension_numbers<[1], [0], [0], [1], [0, 0, 1, 1], [], []>} : vector<8x8xbf16>, vector<8x128xbf16>, vector<8x128xf32> -> vector<8x128xf32>
    %c0_21 = arith.constant 0 : index
    %c0_22 = arith.constant 0 : index
    %27 = vector.load %arg9[%c0_21, %c0_22] : memref<1x128xf32, #tpu.memory_space<vmem>>, vector<1x128xf32>
    %28 = vector.broadcast %27 : vector<1x128xf32> to vector<8x128xf32>
    %29 = arith.addf %26, %28 : vector<8x128xf32>
    %c0_23 = arith.constant 0 : index
    %c0_24 = arith.constant 0 : index
    %30 = vector.load %arg10[%c0_23, %c0_24] : memref<8x128xf32, #tpu.memory_space<vmem>>, vector<8x128xf32>
    tpu.vector_store %arg10[%c0_23, %c0_24], %29 {strides = array<i32>} : memref<8x128xf32, #tpu.memory_space<vmem>>, vector<8x128xf32>,
    return
  }
  func.func @transform_0(%arg0: i32) -> (i32, i32) {
    %c0_i32 = arith.constant 0 : i32
    %c0_i32_0 = arith.constant 0 : i32
    return %arg0, %c0_i32 : i32, i32
  }
  func.func @transform_1(%arg0: i32) -> (i32, i32) {
    %c0_i32 = arith.constant 0 : i32
    %c0_i32_0 = arith.constant 0 : i32
    %c0_i32_1 = arith.constant 0 : i32
    return %c0_i32, %c0_i32_0 : i32, i32
  }
  func.func @transform_2(%arg0: i32) -> (i32, i32) {
    %c0_i32 = arith.constant 0 : i32
    %c0_i32_0 = arith.constant 0 : i32
    %c0_i32_1 = arith.constant 0 : i32
    return %c0_i32, %c0_i32_0 : i32, i32
  }
  func.func @transform_3(%arg0: i32) -> (i32, i32) {
    %c0_i32 = arith.constant 0 : i32
    %c0_i32_0 = arith.constant 0 : i32
    %c0_i32_1 = arith.constant 0 : i32
    return %c0_i32, %c0_i32_0 : i32, i32
  }
  func.func @transform_4(%arg0: i32) -> (i32, i32) {
    %c0_i32 = arith.constant 0 : i32
    %c0_i32_0 = arith.constant 0 : i32
    %c0_i32_1 = arith.constant 0 : i32
    return %c0_i32, %c0_i32_0 : i32, i32
  }
  func.func @transform_5(%arg0: i32) -> (i32, i32) {
    %c0_i32 = arith.constant 0 : i32
    %c0_i32_0 = arith.constant 0 : i32
    %c0_i32_1 = arith.constant 0 : i32
    return %c0_i32, %c0_i32_0 : i32, i32
  }
  func.func @transform_6(%arg0: i32) -> (i32, i32) {
    %c0_i32 = arith.constant 0 : i32
    %c0_i32_0 = arith.constant 0 : i32
    %c0_i32_1 = arith.constant 0 : i32
    return %c0_i32, %c0_i32_0 : i32, i32
  }
  func.func @transform_7(%arg0: i32) -> (i32, i32) {
    %c0_i32 = arith.constant 0 : i32
    %c0_i32_0 = arith.constant 0 : i32
    %c0_i32_1 = arith.constant 0 : i32
    return %c0_i32, %c0_i32_0 : i32, i32
  }
  func.func @transform_8(%arg0: i32) -> (i32, i32) {
    %c0_i32 = arith.constant 0 : i32
    %c0_i32_0 = arith.constant 0 : i32
    %c0_i32_1 = arith.constant 0 : i32
    return %c0_i32, %c0_i32_0 : i32, i32
  }
  func.func @transform_9(%arg0: i32) -> (i32, i32) {
    %c0_i32 = arith.constant 0 : i32
    %c0_i32_0 = arith.constant 0 : i32
    return %arg0, %c0_i32 : i32, i32
  }
}

</mosaic_0001>

<llo_original>
// kernel: tpu_custom_call.1
$region0: #{tpu_custom_call.1}
  #allocation0 [shape = 'u32[]', space=smem, size = 0x4, offset = 0x4, fixed_abs, tag = 'smem constant byte address 0x4 - core index']
  #allocation1 [shape = 'u32[144,128]{1,0:T(1,128)}', space=vmem, size = 0x12000, scoped, tag = 'internal scratch']
  %s0 = inlined_call_operand.vmem [shape: bf16[8,16], index: 0, kind: input, shape index: {}]
  %s1 = inlined_call_operand.vmem [shape: bf16[16,32], index: 1, kind: input, shape index: {}]
  %s2 = inlined_call_operand.vmem [shape: f32[1,32], index: 2, kind: input, shape index: {}]
  %s3 = inlined_call_operand.vmem [shape: bf16[32,16], index: 3, kind: input, shape index: {}]
  %s4 = inlined_call_operand.vmem [shape: f32[1,16], index: 4, kind: input, shape index: {}]
  %s5 = inlined_call_operand.vmem [shape: bf16[16,8], index: 5, kind: input, shape index: {}]
  %s6 = inlined_call_operand.vmem [shape: f32[1,8], index: 6, kind: input, shape index: {}]
  %s7 = inlined_call_operand.vmem [shape: bf16[8,128], index: 7, kind: input, shape index: {}]
  %s8 = inlined_call_operand.vmem [shape: f32[1,128], index: 8, kind: input, shape index: {}]
  %s9 = inlined_call_operand.hbm [shape: f32[8,128], index: 9, kind: output, shape index: {}]
  %s10 = sld [smem:[#allocation0]]
  $region46: #{tpu_custom_call.1} parent=0
    _
  %s12 = ssub.s32 1, %s10
  %s13 = scalar_select 0, %s12, %s10
  $region1: #{tpu_custom_call.1} parent=0
    #allocation2 [shape = 'u8[4096]{0}', space=vmem, size = 0x1000, scoped, tag = 'output window, operand 0, single buffered']
    #allocation3 [shape = 's32[1]{0}', space=sflag, size = 0x4, scoped, tag = 'scoped memory for tpu_custom_call.1']
    %14 = vsyncpa [#allocation3], 0
    // Predicated region
    $region2: #{tpu_custom_call.1} parent=1 // pred_check
      _
    $region3: #{tpu_custom_call.1} parent=1 // pred_check_branch
      %16 = sbr.rel (0) target = $region5
    $region4: #{tpu_custom_call.1} parent=1 // pred_region
      _
    $region5: #{tpu_custom_call.1} parent=1 // pred_fallthru
      _
    // Predicated region
    $region6: #{tpu_custom_call.1} parent=1 // pred_check
      _
    $region7: #{tpu_custom_call.1} parent=1 // pred_check_branch
      %18 = sbr.rel (0) target = $region9
    $region8: #{tpu_custom_call.1} parent=1 // pred_region
      _
    $region9: #{tpu_custom_call.1} parent=1 // pred_fallthru
      _
    // Predicated region
    $region10: #{tpu_custom_call.1} parent=1 // pred_check
      _
    $region11: #{tpu_custom_call.1} parent=1 // pred_check_branch
      %20 = sbr.rel (0) target = $region13
    $region12: #{tpu_custom_call.1} parent=1 // pred_region
      _
    $region13: #{tpu_custom_call.1} parent=1 // pred_fallthru
      _
    // Predicated region
    $region14: #{tpu_custom_call.1} parent=1 // pred_check
      _
    $region15: #{tpu_custom_call.1} parent=1 // pred_check_branch
      %22 = sbr.rel (0) target = $region17
    $region16: #{tpu_custom_call.1} parent=1 // pred_region
      _
    $region17: #{tpu_custom_call.1} parent=1 // pred_fallthru
      _
    // Predicated region
    $region18: #{tpu_custom_call.1} parent=1 // pred_check
      _
    $region19: #{tpu_custom_call.1} parent=1 // pred_check_branch
      %24 = sbr.rel (0) target = $region21
    $region20: #{tpu_custom_call.1} parent=1 // pred_region
      _
    $region21: #{tpu_custom_call.1} parent=1 // pred_fallthru
      _
    // Predicated region
    $region22: #{tpu_custom_call.1} parent=1 // pred_check
      _
    $region23: #{tpu_custom_call.1} parent=1 // pred_check_branch
      %26 = sbr.rel (0) target = $region25
    $region24: #{tpu_custom_call.1} parent=1 // pred_region
      _
    $region25: #{tpu_custom_call.1} parent=1 // pred_fallthru
      _
    // Predicated region
    $region26: #{tpu_custom_call.1} parent=1 // pred_check
      _
    $region27: #{tpu_custom_call.1} parent=1 // pred_check_branch
      %28 = sbr.rel (0) target = $region29
    $region28: #{tpu_custom_call.1} parent=1 // pred_region
      _
    $region29: #{tpu_custom_call.1} parent=1 // pred_fallthru
      _
    // Predicated region
    $region30: #{tpu_custom_call.1} parent=1 // pred_check
      _
    $region31: #{tpu_custom_call.1} parent=1 // pred_check_branch
      %30 = sbr.rel (0) target = $region33
    $region32: #{tpu_custom_call.1} parent=1 // pred_region
      _
    $region33: #{tpu_custom_call.1} parent=1 // pred_fallthru
      _
    // Predicated region
    $region34: #{tpu_custom_call.1} parent=1 // pred_check
      _
    $region35: #{tpu_custom_call.1} parent=1 // pred_check_branch
      %32 = sbr.rel (0) target = $region37
    $region36: #{tpu_custom_call.1} parent=1 // pred_region
      _
    $region37: #{tpu_custom_call.1} parent=1 // pred_fallthru
      _
    %v34 = vld [vmem:[%s0] sm:$0xf]
    %v35 = vld [vmem:[%s1] sm:$0xf]
    %v36 = vld [vmem:[%s1 + $0x4] sm:$0xf]
    %v37 = vld [vmem:[%s2] sm:$0x1]
    %v39 = vlaneseq
    %v40 = vshrl.u32 %v39, 7
    %v41 = vsub.s32 0, %v40
    %v42 = vrot.slane %v37, %v41
    %v46 = vunpack.c.l.b16 %v35
    %v47 = vunpack.c.l.b16 %v36
    %v48 = vpack.c.b16 %v47, %v46
    %vm50 = vcmask 130048
    %v52 = vsel %vm50, %v34, 0
    %54 = vmatprep.subr.bf16.mxu0 0
    %55 = vmatpush1.bf16.msra.mxu0 %v48
    %56 = vmatprep.subr.bf16.mxu0 0
    %57 = vmatpush1.bf16.msra.mxu0 0
    %58 = vmatprep.subr.bf16.mxu0 0
    %59 = vmatpush1.bf16.msra.mxu0 0
    %60 = vmatprep.subr.bf16.mxu0 0
    %61 = vmatpush1.bf16.msra.mxu0 0
    %62 = vmatprep.subr.bf16.mxu0 0
    %63 = vmatpush1.bf16.msra.mxu0 0
    %64 = vmatprep.subr.bf16.mxu0 0
    %65 = vmatpush1.bf16.msra.mxu0 0
    %66 = vmatprep.subr.bf16.mxu0 0
    %67 = vmatpush1.bf16.msra.mxu0 0
    %68 = vmatprep.subr.bf16.mxu0 0
    %69 = vmatpush1.bf16.msra.mxu0 0
    %70 = vmatprep.subr.bf16.mxu0 0
    %71 = vmatpush1.bf16.msra.mxu0 0
    %72 = vmatprep.subr.bf16.mxu0 0
    %73 = vmatpush1.bf16.msra.mxu0 0
    %74 = vmatprep.subr.bf16.mxu0 0
    %75 = vmatpush1.bf16.msra.mxu0 0
    %76 = vmatprep.subr.bf16.mxu0 0
    %77 = vmatpush1.bf16.msra.mxu0 0
    %78 = vmatprep.subr.bf16.mxu0 0
    %79 = vmatpush1.bf16.msra.mxu0 0
    %80 = vmatprep.subr.bf16.mxu0 0
    %81 = vmatpush1.bf16.msra.mxu0 0
    %82 = vmatprep.subr.bf16.mxu0 0
    %83 = vmatpush1.bf16.msra.mxu0 0
    %84 = vmatprep.subr.bf16.mxu0 0
    %85 = vmatpush1.bf16.msra.mxu0 0
    %86 = vmatprep.mubr.bf16.mxu0 0
    %87 = vmatmul.mubr.bf16.gmra.mrb[0].mxu0 %v52
    %v88 = vpop.f32.mrb[0].mxu0
    %v89 = vadd.f32 %v42, %v88
    %v90 = vpop.f32.mrb[0].mxu0
    %v91 = vpop.f32.mrb[0].mxu0
    %v92 = vpop.f32.mrb[0].mxu0
    %93 = vdwg.mxu0
    %v94 = vmax.f32 %v89, 0.0
    %v95 = vpack.c.bf16 %v94, %v94
    %v96 = vld [vmem:[%s3] sm:$0xf]
    %v97 = vld [vmem:[%s3 + $0x4] sm:$0xf]
    %v98 = vld [vmem:[%s3 + $0x8] sm:$0xf]
    %v99 = vld [vmem:[%s3 + $0xc] sm:$0xf]
    %v100 = vld [vmem:[%s4] sm:$0x1]
    %v102 = vlaneseq
    %v103 = vshrl.u32 %v102, 7
    %v104 = vsub.s32 0, %v103
    %v105 = vrot.slane %v100, %v104
    %v111 = vunpack.c.l.b16 %v96
    %v112 = vunpack.c.l.b16 %v97
    %v113 = vunpack.c.l.b16 %v98
    %v114 = vunpack.c.l.b16 %v99
    %v115 = vpack.c.b16 %v112, %v111
    %v116 = vpack.c.b16 %v114, %v113
    %vm119 = vcmask 261120
    %v121 = vsel %vm119, %v95, 0
    %123 = vmatprep.subr.bf16.mxu0 0
    %124 = vmatpush1.bf16.msra.mxu0 %v115
    %125 = vmatprep.subr.bf16.mxu0 0
    %126 = vmatpush1.bf16.msra.mxu0 %v116
    %127 = vmatprep.subr.bf16.mxu0 0
    %128 = vmatpush1.bf16.msra.mxu0 0
    %129 = vmatprep.subr.bf16.mxu0 0
    %130 = vmatpush1.bf16.msra.mxu0 0
    %131 = vmatprep.subr.bf16.mxu0 0
    %132 = vmatpush1.bf16.msra.mxu0 0
    %133 = vmatprep.subr.bf16.mxu0 0
    %134 = vmatpush1.bf16.msra.mxu0 0
    %135 = vmatprep.subr.bf16.mxu0 0
    %136 = vmatpush1.bf16.msra.mxu0 0
    %137 = vmatprep.subr.bf16.mxu0 0
    %138 = vmatpush1.bf16.msra.mxu0 0
    %139 = vmatprep.subr.bf16.mxu0 0
    %140 = vmatpush1.bf16.msra.mxu0 0
    %141 = vmatprep.subr.bf16.mxu0 0
    %142 = vmatpush1.bf16.msra.mxu0 0
    %143 = vmatprep.subr.bf16.mxu0 0
    %144 = vmatpush1.bf16.msra.mxu0 0
    %145 = vmatprep.subr.bf16.mxu0 0
    %146 = vmatpush1.bf16.msra.mxu0 0
    %147 = vmatprep.subr.bf16.mxu0 0
    %148 = vmatpush1.bf16.msra.mxu0 0
    %149 = vmatprep.subr.bf16.mxu0 0
    %150 = vmatpush1.bf16.msra.mxu0 0
    %151 = vmatprep.subr.bf16.mxu0 0
    %152 = vmatpush1.bf16.msra.mxu0 0
    %153 = vmatprep.subr.bf16.mxu0 0
    %154 = vmatpush1.bf16.msra.mxu0 0
    %155 = vmatprep.mubr.bf16.mxu0 0
    %156 = vmatmul.mubr.bf16.gmra.mrb[0].mxu0 %v121
    %v157 = vpop.f32.mrb[0].mxu0
    %v158 = vadd.f32 %v105, %v157
    %v159 = vpop.f32.mrb[0].mxu0
    %v160 = vpop.f32.mrb[0].mxu0
    %v161 = vpop.f32.mrb[0].mxu0
    %162 = vdwg.mxu0
    %v163 = vmax.f32 %v158, 0.0
    %v164 = vpack.c.bf16 %v163, %v163
    %v165 = vld [vmem:[%s5] sm:$0xf]
    %v166 = vld [vmem:[%s5 + $0x4] sm:$0xf]
    %v167 = vld [vmem:[%s6] sm:$0x1]
    %v169 = vlaneseq
    %v170 = vshrl.u32 %v169, 7
    %v171 = vsub.s32 0, %v170
    %v172 = vrot.slane %v167, %v171
    %v176 = vunpack.c.l.b16 %v165
    %v177 = vunpack.c.l.b16 %v166
    %v178 = vpack.c.b16 %v177, %v176
    %v181 = vsel %vm50, %v164, 0
    %183 = vmatprep.subr.bf16.mxu0 0
    %184 = vmatpush1.bf16.msra.mxu0 %v178
    %185 = vmatprep.subr.bf16.mxu0 0
    %186 = vmatpush1.bf16.msra.mxu0 0
    %187 = vmatprep.subr.bf16.mxu0 0
    %188 = vmatpush1.bf16.msra.mxu0 0
    %189 = vmatprep.subr.bf16.mxu0 0
    %190 = vmatpush1.bf16.msra.mxu0 0
    %191 = vmatprep.subr.bf16.mxu0 0
    %192 = vmatpush1.bf16.msra.mxu0 0
    %193 = vmatprep.subr.bf16.mxu0 0
    %194 = vmatpush1.bf16.msra.mxu0 0
    %195 = vmatprep.subr.bf16.mxu0 0
    %196 = vmatpush1.bf16.msra.mxu0 0
    %197 = vmatprep.subr.bf16.mxu0 0
    %198 = vmatpush1.bf16.msra.mxu0 0
    %199 = vmatprep.subr.bf16.mxu0 0
    %200 = vmatpush1.bf16.msra.mxu0 0
    %201 = vmatprep.subr.bf16.mxu0 0
    %202 = vmatpush1.bf16.msra.mxu0 0
    %203 = vmatprep.subr.bf16.mxu0 0
    %204 = vmatpush1.bf16.msra.mxu0 0
    %205 = vmatprep.subr.bf16.mxu0 0
    %206 = vmatpush1.bf16.msra.mxu0 0
    %207 = vmatprep.subr.bf16.mxu0 0
    %208 = vmatpush1.bf16.msra.mxu0 0
    %209 = vmatprep.subr.bf16.mxu0 0
    %210 = vmatpush1.bf16.msra.mxu0 0
    %211 = vmatprep.subr.bf16.mxu0 0
    %212 = vmatpush1.bf16.msra.mxu0 0
    %213 = vmatprep.subr.bf16.mxu0 0
    %214 = vmatpush1.bf16.msra.mxu0 0
    %215 = vmatprep.mubr.bf16.mxu0 0
    %216 = vmatmul.mubr.bf16.gmra.mrb[0].mxu0 %v181
    %v217 = vpop.f32.mrb[0].mxu0
    %v218 = vadd.f32 %v172, %v217
    %v219 = vpop.f32.mrb[0].mxu0
    %v220 = vpop.f32.mrb[0].mxu0
    %v221 = vpop.f32.mrb[0].mxu0
    %222 = vdwg.mxu0
    %v223 = vmax.f32 %v218, 0.0
    %v224 = vpack.c.bf16 %v223, %v223
    %v225 = vld [vmem:[%s7] sm:$0xf]
    %v226 = vld [vmem:[%s8] sm:$0x1]
    %v228 = vlaneseq
    %v229 = vshrl.u32 %v228, 7
    %v230 = vsub.s32 0, %v229
    %v231 = vrot.slane %v226, %v230
    %vm233 = vcmask 64512
    %v235 = vsel %vm233, %v224, 0
    %vm237 = vcmask 1043456
    %v239 = vsel %vm237, %v225, 0
    %241 = vmatprep.subr.bf16.mxu0 0
    %242 = vmatpush1.bf16.msra.mxu0 %v239
    %243 = vmatprep.subr.bf16.mxu0 0
    %244 = vmatpush1.bf16.msra.mxu0 0
    %245 = vmatprep.subr.bf16.mxu0 0
    %246 = vmatpush1.bf16.msra.mxu0 0
    %247 = vmatprep.subr.bf16.mxu0 0
    %248 = vmatpush1.bf16.msra.mxu0 0
    %249 = vmatprep.subr.bf16.mxu0 0
    %250 = vmatpush1.bf16.msra.mxu0 0
    %251 = vmatprep.subr.bf16.mxu0 0
    %252 = vmatpush1.bf16.msra.mxu0 0
    %253 = vmatprep.subr.bf16.mxu0 0
    %254 = vmatpush1.bf16.msra.mxu0 0
    %255 = vmatprep.subr.bf16.mxu0 0
    %256 = vmatpush1.bf16.msra.mxu0 0
    %257 = vmatprep.subr.bf16.mxu0 0
    %258 = vmatpush1.bf16.msra.mxu0 0
    %259 = vmatprep.subr.bf16.mxu0 0
    %260 = vmatpush1.bf16.msra.mxu0 0
    %261 = vmatprep.subr.bf16.mxu0 0
    %262 = vmatpush1.bf16.msra.mxu0 0
    %263 = vmatprep.subr.bf16.mxu0 0
    %264 = vmatpush1.bf16.msra.mxu0 0
    %265 = vmatprep.subr.bf16.mxu0 0
    %266 = vmatpush1.bf16.msra.mxu0 0
    %267 = vmatprep.subr.bf16.mxu0 0
    %268 = vmatpush1.bf16.msra.mxu0 0
    %269 = vmatprep.subr.bf16.mxu0 0
    %270 = vmatpush1.bf16.msra.mxu0 0
    %271 = vmatprep.subr.bf16.mxu0 0
    %272 = vmatpush1.bf16.msra.mxu0 0
    %273 = vmatprep.mubr.bf16.mxu0 0
    %274 = vmatmul.mubr.bf16.gmra.mrb[0].mxu0 %v235
    %v275 = vpop.f32.mrb[0].mxu0
    %v276 = vadd.f32 %v231, %v275
    %v277 = vpop.f32.mrb[0].mxu0
    %v278 = vpop.f32.mrb[0].mxu0
    %v279 = vpop.f32.mrb[0].mxu0
    %280 = vdwg.mxu0
    %281 = vst [vmem:[#allocation2] sm:$0xff] %v276
    // Predicated region
    $region38: #{tpu_custom_call.1} parent=1 // pred_check
      _
    $region39: #{tpu_custom_call.1} parent=1 // pred_check_branch
      %283 = sbr.rel (0) target = $region41
    $region40: #{tpu_custom_call.1} parent=1 // pred_region
      %s285 = ssub.s32 128, 128
      %286 = vsyncadd [#allocation3], %s285
      %s288 = sshll.u32 [#allocation2], 4
      %s289 = int_to_ptr.vmem [resolvable:$true] %s288
      %291 = dma.vmem_to_hbm [thread:$0]  %s289, 128, %s9, [#allocation3]
    $region41: #{tpu_custom_call.1} parent=1 // pred_fallthru
      _
    // Predicated region
    $region42: #{tpu_custom_call.1} parent=1 // pred_check
      _
    $region43: #{tpu_custom_call.1} parent=1 // pred_check_branch
      %293 = sbr.rel (0) target = $region45
    $region44: #{tpu_custom_call.1} parent=1 // pred_region
      %294 = dma.done [#allocation3], 128
    $region45: #{tpu_custom_call.1} parent=1 // pred_fallthru
      _
    %295 = vsyncpa [#allocation3], 1

</llo_original>
